<compile_context>
chip_gen: v7x
topology: tpu7x:2x2x1
jax: 0.10.0
libtpu: 0.0.40
codegen_flags: <defaults>
</compile_context>

<pallas_src>
import functools

import jax
import jax.numpy as jnp
from jax.experimental import pallas as pl
from jax.experimental.pallas import tpu as pltpu

_IGNORE_INDEX = -100


def _round_up(v, m):
    return -(-v // m) * m


def _class_sum(e):
    """Sum a (tile_c, tile_p) f32 array over the class (sublane) axis."""
    if e.shape[0] >= 128:
        # Large class tiles: do the class reduction on the otherwise idle MXU.
        ones = jnp.ones((1, e.shape[0]), dtype=jnp.float32)
        return jnp.dot(ones, e, preferred_element_type=jnp.float32)
    return jnp.sum(e, axis=0, keepdims=True)


def _ce_kernel(x_ref, t_ref, loss_ref, cnt_ref, m_sc, s_sc, g_sc, *,
               p_total, tile_p, c_total, tile_c, num_c_tiles, ignore_index):
    t = t_ref[...]                                              # (1, tile_p) int32 class ids

    def finalize(nll):
        valid = t != ignore_index
        if p_total % tile_p != 0:                               # static: ragged pixel tiles exist
            pix = (pl.program_id(1) * tile_p
                   + jax.lax.broadcasted_iota(jnp.int32, (1, tile_p), 1))
            valid = valid & (pix < p_total)
        nll = jnp.where(valid, nll, 0.0)
        loss_ref[...] = jnp.broadcast_to(jnp.sum(nll), loss_ref.shape)
        cnt_ref[...] = jnp.broadcast_to(jnp.sum(valid.astype(jnp.float32)), cnt_ref.shape)

    if num_c_tiles == 1:
        # Single pass: whole class extent resident. Gather the target logit from the already
        # max-shifted tensor so only one (C, tile_p) f32 temp chain stays live.
        x = x_ref[...].astype(jnp.float32)                      # (C, tile_p)
        cls = jax.lax.broadcasted_iota(jnp.int32, x.shape, 0)
        m = jnp.max(x, axis=0, keepdims=True)                   # (1, tile_p)
        xm = x - m
        tgt = jnp.sum(jnp.where(cls == t, xm, 0.0), axis=0, keepdims=True)   # x[t] - m
        s = _class_sum(jnp.exp(xm))
        finalize(jnp.log(s) - tgt)                              # == logsumexp(x) - x[t]
        return

    # --- Class-tiled path: online logsumexp over the innermost "arbitrary" grid axis. ---
    k = pl.program_id(2)

    @pl.when(k == 0)
    def _init():
        m_sc[...] = jnp.full_like(m_sc, -jnp.inf)
        s_sc[...] = jnp.zeros_like(s_sc)
        g_sc[...] = jnp.zeros_like(g_sc)

    x = x_ref[...].astype(jnp.float32)                          # (tile_c, tile_p)
    cls = k * tile_c + jax.lax.broadcasted_iota(jnp.int32, x.shape, 0)
    if c_total % tile_c != 0:                                   # static: mask padded class rows
        x = jnp.where(cls < c_total, x, -jnp.inf)

    # Raw target logit accumulates across class tiles (matches exactly one row overall).
    g_sc[...] += jnp.sum(jnp.where(cls == t, x, 0.0), axis=0, keepdims=True)

    m_prev = m_sc[...]
    m_new = jnp.maximum(m_prev, jnp.max(x, axis=0, keepdims=True))
    s_sc[...] = jnp.exp(m_prev - m_new) * s_sc[...] + _class_sum(jnp.exp(x - m_new))
    m_sc[...] = m_new

    @pl.when(k == num_c_tiles - 1)
    def _done():
        finalize(m_sc[...] + jnp.log(s_sc[...]) - g_sc[...])


def _vmem_limit_bytes():
    """Scoped-VMEM budget: ~48 MiB on v7x (64 MiB physical), 64 MiB on v5e/v6e (128 MiB)."""
    try:
        cap = int(pltpu.get_tpu_info().vmem_capacity_bytes)
    except Exception:
        cap = 64 * 1024 * 1024
    return int(min(64 * 1024 * 1024, max(32 * 1024 * 1024, cap * 3 // 4)))


def _choose_tiles(p, c, dtype, vmem_limit):
    """Pick (tile_p, tile_c) from a VMEM model that includes sublane padding."""
    itemsize = jnp.dtype(dtype).itemsize
    sub = max(8, 32 // itemsize)               # sublane packing: 8 for f32, 16 for bf16
    c_pad = _round_up(c, sub)

    # ~1/6 of the scoped limit per in-flight step: double-buffered inputs take ~1/3, the rest
    # is headroom for f32 temps of the same lane extent. Per pixel lane we pay c_pad*4 bytes
    # (f32-equivalent logit column) + 32 bytes (8 padded int32 target sublanes).
    target_in = vmem_limit // 6
    lane_bytes = c_pad * 4 + 32

    if lane_bytes * 128 <= target_in:
        tile_p = (target_in // lane_bytes) // 128 * 128
        tile_p = p if p <= tile_p else tile_p
        return tile_p, c

    # Vocab-scale C: tile the class axis too (online logsumexp).
    tile_p = p if p <= 512 else 512
    tile_c = (vmem_limit // 12 // (tile_p * 4)) // sub * sub
    tile_c = max(sub, tile_c)
    if tile_c >= c:
        tile_c = c
    return tile_p, tile_c


def _even_parallel_steps(p, tile_p, n):
    """Prefer an even total of parallel grid steps so both v7x TensorCores get work."""
    if (n * pl.cdiv(p, tile_p)) % 2 == 0 or p <= 128:
        return tile_p
    cand = (min(tile_p, p) // 128) * 128
    while cand >= 128:
        if (n * pl.cdiv(p, cand)) % 2 == 0:
            return cand
        cand -= 128
    return tile_p


def cross_entropy_loss(logits_nchw: jax.Array, targets_nhw: jax.Array, *,
                       ignore_index: int = _IGNORE_INDEX,
                       tile_p: int | None = None,
                       tile_c: int | None = None) -> jax.Array:
    """nn.CrossEntropyLoss()(logits, targets): mean reduction, ignore_index=-100.

    Note: if every target equals ignore_index the result is NaN (0/0), matching PyTorch.
    """
    n, c, h, w = logits_nchw.shape
    assert targets_nhw.shape == (n, h, w)
    p = h * w

    x = logits_nchw.reshape(n, c, p)                  # free reshape, no NCHW->NHWC transpose
    t = targets_nhw.reshape(n, 1, p).astype(jnp.int32)

    vmem_limit = _vmem_limit_bytes()
    auto_p, auto_c = _choose_tiles(p, c, logits_nchw.dtype, vmem_limit)
    if tile_p is None:
        tile_p = _even_parallel_steps(p, auto_p, n)
    if tile_c is None:
        tile_c = auto_c
    tile_c = min(tile_c, c)

    num_p = pl.cdiv(p, tile_p)
    num_c = pl.cdiv(c, tile_c)
    if num_c == 1:
        tile_c = c
    grid = (n, num_p, num_c)

    kernel = functools.partial(
        _ce_kernel, p_total=p, tile_p=tile_p, c_total=c, tile_c=tile_c,
        num_c_tiles=num_c, ignore_index=ignore_index)

    out_shapes = (
        jax.ShapeDtypeStruct((n, num_p, 1, 128), jnp.float32),   # per-tile loss sums
        jax.ShapeDtypeStruct((n, num_p, 1, 128), jnp.float32),   # per-tile valid-pixel counts
    )

    scratch_p = tile_p if num_c > 1 else 128          # tiny dummies on the single-pass path
    scratch_shapes = [pltpu.VMEM((1, scratch_p), jnp.float32) for _ in range(3)]

    bytes_accessed = (x.size * x.dtype.itemsize + t.size * 4 + 2 * n * num_p * 128 * 4)
    cost = pl.CostEstimate(flops=6 * n * p * c,
                           transcendentals=n * p * (c + 1),
                           bytes_accessed=int(bytes_accessed))

    loss_parts, cnt_parts = pl.pallas_call(
        kernel,
        out_shape=out_shapes,
        grid_spec=pltpu.PrefetchScalarGridSpec(
            num_scalar_prefetch=0,
            grid=grid,
            in_specs=[
                pl.BlockSpec((None, tile_c, tile_p), lambda i, j, k: (i, k, j)),
                pl.BlockSpec((None, 1, tile_p), lambda i, j, k: (i, 0, j)),
            ],
            out_specs=[
                pl.BlockSpec((None, None, 1, 128), lambda i, j, k: (i, j, 0, 0)),
                pl.BlockSpec((None, None, 1, 128), lambda i, j, k: (i, j, 0, 0)),
            ],
            scratch_shapes=scratch_shapes,
        ),
        compiler_params=pltpu.CompilerParams(
            dimension_semantics=("parallel", "parallel", "arbitrary"),
            vmem_limit_bytes=vmem_limit,
        ),
        cost_estimate=cost,
    )(x, t)

    total_loss = jnp.sum(loss_parts[:, :, 0, 0])
    total_cnt = jnp.sum(cnt_parts[:, :, 0, 0])
    return total_loss / total_cnt


def _reference_ce(logits_nchw, targets_nhw, ignore_index=_IGNORE_INDEX):
    n, c, h, w = logits_nchw.shape
    x = jnp.transpose(logits_nchw, (0, 2, 3, 1)).reshape(-1, c).astype(jnp.float32)
    t = targets_nhw.reshape(-1)
    logp = jax.nn.log_softmax(x, axis=-1)
    valid = t != ignore_index
    t_safe = jnp.where(valid, t, 0)
    nll = -jnp.take_along_axis(logp, t_safe[:, None], axis=-1)[:, 0]
    nll = jnp.where(valid, nll, 0.0)
    return jnp.sum(nll) / jnp.sum(valid).astype(jnp.float32)


if __name__ == "__main__":
    key = jax.random.PRNGKey(0)
    k1, k2, k3, k4, k5, k6 = jax.random.split(key, 6)

    # 1) Primary case: NCHW f32 logits + NHW integer targets (segmentation-style).
    N, C, H, W = 2, 4, 16, 16
    logits = jax.random.normal(k1, (N, C, H, W), dtype=jnp.float32)
    targets = jax.random.randint(k2, (N, H, W), 0, C, dtype=jnp.int32)
    loss = jax.block_until_ready(cross_entropy_loss(logits, targets))
    ref = jax.block_until_ready(_reference_ce(logits, targets))
    assert jnp.allclose(loss, ref, rtol=1e-5, atol=1e-5), (loss, ref)

    # 2) Ragged pixel count + ignore_index; odd N exercises the even-parallel-steps split.
    logits2 = jax.random.normal(k3, (1, 4, 15, 15), dtype=jnp.float32)
    targets2 = jax.random.randint(k4, (1, 15, 15), 0, 4, dtype=jnp.int32)
    targets2 = targets2.at[0, 0, :5].set(_IGNORE_INDEX)
    loss2 = jax.block_until_ready(cross_entropy_loss(logits2, targets2))
    ref2 = jax.block_until_ready(_reference_ce(logits2, targets2))
    assert jnp.allclose(loss2, ref2, rtol=1e-5, atol=1e-5), (loss2, ref2)

    # 3) Class-tiled (online logsumexp) path with a ragged last class tile.
    logits3 = jax.random.normal(k5, (1, 20, 8, 8), dtype=jnp.float32)
    targets3 = jax.random.randint(k6, (1, 8, 8), 0, 20, dtype=jnp.int32)
    targets3 = targets3.at[0, 3, :4].set(_IGNORE_INDEX)
    loss3 = jax.block_until_ready(cross_entropy_loss(logits3, targets3, tile_c=8))
    ref3 = jax.block_until_ready(_reference_ce(logits3, targets3))
    assert jnp.allclose(loss3, ref3, rtol=1e-5, atol=1e-5), (loss3, ref3)

    # 4) bf16 logits (upcast to f32 inside the kernel; bf16 sublane-packing path in the chooser).
    loss4 = jax.block_until_ready(cross_entropy_loss(logits.astype(jnp.bfloat16), targets))
    ref4 = jax.block_until_ready(_reference_ce(logits.astype(jnp.bfloat16), targets))
    assert jnp.allclose(loss4, ref4, rtol=1e-5, atol=1e-5), (loss4, ref4)

    # TODO(synk): optional class `weight` tensor, reduction='sum'/'none', and PyTorch's hard
    # error on out-of-range (non-ignore) target indices are not implemented (module uses defaults).
    print("KERNEL_OK")
</pallas_src>

<mosaic_0001>
module attributes {stable_mosaic.version = 11 : i64} {
  func.func @_ce_kernel(%arg0: i32, %arg1: i32, %arg2: i32, %arg3: memref<1x4x256xf32, #tpu.memory_space<vmem>>, %arg4: memref<1x1x256xi32, #tpu.memory_space<vmem>>, %arg5: memref<1x1x1x128xf32, #tpu.memory_space<vmem>>, %arg6: memref<1x1x1x128xf32, #tpu.memory_space<vmem>>, %arg7: memref<1x128xf32, #tpu.memory_space<vmem>>, %arg8: memref<1x128xf32, #tpu.memory_space<vmem>>, %arg9: memref<1x128xf32, #tpu.memory_space<vmem>>) attributes {dimension_semantics = [#tpu.dimension_semantics<parallel>, #tpu.dimension_semantics<parallel>, #tpu.dimension_semantics<arbitrary>], iteration_bounds = array<i64: 2, 1, 1>, scalar_prefetch = 0 : i64, scratch_operands = 3 : i64, tpu.core_type = #tpu.core_type<tc>, window_params = [{transform_indices = @transform_0, window_bounds = array<i64: 1, 4, 256>}, {transform_indices = @transform_1, window_bounds = array<i64: 1, 1, 256>}, {transform_indices = @transform_2, window_bounds = array<i64: 1, 1, 1, 128>}, {transform_indices = @transform_3, window_bounds = array<i64: 1, 1, 1, 128>}]} {
    %c0 = arith.constant 0 : index
    %c0_0 = arith.constant 0 : index
    %c0_1 = arith.constant 0 : index
    %0 = vector.load %arg4[%c0, %c0_0, %c0_1] : memref<1x1x256xi32, #tpu.memory_space<vmem>>, vector<1x1x256xi32>
    %1 = vector.shape_cast %0 : vector<1x1x256xi32> to vector<1x256xi32>
    %c0_2 = arith.constant 0 : index
    %c0_3 = arith.constant 0 : index
    %c0_4 = arith.constant 0 : index
    %2 = vector.load %arg3[%c0_2, %c0_3, %c0_4] : memref<1x4x256xf32, #tpu.memory_space<vmem>>, vector<1x4x256xf32>
    %3 = vector.shape_cast %2 : vector<1x4x256xf32> to vector<4x256xf32>
    %4 = tpu.iota {dimensions = array<i32: 0>} : vector<4x256xi32>
    %cst = arith.constant dense<0xFF800000> : vector<256xf32>
    %5 = vector.multi_reduction <maximumf>, %3, %cst [0] : vector<4x256xf32> to vector<256xf32>
    %6 = vector.shape_cast %5 : vector<256xf32> to vector<1x256xf32>
    %7 = vector.broadcast %6 : vector<1x256xf32> to vector<4x256xf32>
    %8 = arith.subf %3, %7 : vector<4x256xf32>
    %9 = vector.broadcast %1 : vector<1x256xi32> to vector<4x256xi32>
    %10 = arith.cmpi eq, %4, %9 : vector<4x256xi32>
    %cst_5 = arith.constant 0.000000e+00 : f32
    %11 = vector.broadcast %cst_5 : f32 to vector<4x256xf32>
    %12 = arith.select %10, %8, %11 : vector<4x256xi1>, vector<4x256xf32>
    %cst_6 = arith.constant dense<0.000000e+00> : vector<256xf32>
    %13 = vector.multi_reduction <add>, %12, %cst_6 [0] : vector<4x256xf32> to vector<256xf32>
    %14 = vector.shape_cast %13 : vector<256xf32> to vector<1x256xf32>
    %15 = math.exp %8 : vector<4x256xf32>
    %cst_7 = arith.constant dense<0.000000e+00> : vector<256xf32>
    %16 = vector.multi_reduction <add>, %15, %cst_7 [0] : vector<4x256xf32> to vector<256xf32>
    %17 = vector.shape_cast %16 : vector<256xf32> to vector<1x256xf32>
    %18 = math.log %17 : vector<1x256xf32>
    %19 = arith.subf %18, %14 : vector<1x256xf32>
    %c-100_i32 = arith.constant -100 : i32
    %20 = vector.broadcast %c-100_i32 : i32 to vector<1x256xi32>
    %21 = arith.cmpi ne, %1, %20 : vector<1x256xi32>
    %cst_8 = arith.constant 0.000000e+00 : f32
    %22 = vector.broadcast %cst_8 : f32 to vector<1x256xf32>
    %23 = arith.select %21, %19, %22 : vector<1x256xi1>, vector<1x256xf32>
    %24 = vector.shape_cast %23 : vector<1x256xf32> to vector<1x1x256xf32>
    %cst_9 = arith.constant dense<0.000000e+00> : vector<1xf32>
    %25 = vector.multi_reduction <add>, %24, %cst_9 [1, 2] : vector<1x1x256xf32> to vector<1xf32>
    %26 = vector.shape_cast %25 : vector<1xf32> to vector<1x1x1xf32>
    %27 = vector.extract %26[0, 0, 0] : f32 from vector<1x1x1xf32>
    %28 = vector.broadcast %27 : f32 to vector<1x128xf32>
    %c0_10 = arith.constant 0 : index
    %c0_11 = arith.constant 0 : index
    %c0_12 = arith.constant 0 : index
    %c0_13 = arith.constant 0 : index
    %29 = vector.load %arg5[%c0_10, %c0_11, %c0_12, %c0_13] : memref<1x1x1x128xf32, #tpu.memory_space<vmem>>, vector<1x1x1x128xf32>
    %30 = vector.shape_cast %29 : vector<1x1x1x128xf32> to vector<1x128xf32>
    %31 = vector.shape_cast %28 : vector<1x128xf32> to vector<1x1x1x128xf32>
    tpu.vector_store %arg5[%c0_10, %c0_11, %c0_12, %c0_13], %31 {strides = array<i32>} : memref<1x1x1x128xf32, #tpu.memory_space<vmem>>, vector<1x1x1x128xf32>,
    %32 = arith.extui %21 : vector<1x256xi1> to vector<1x256xi32>
    %33 = arith.sitofp %32 : vector<1x256xi32> to vector<1x256xf32>
    %34 = vector.shape_cast %33 : vector<1x256xf32> to vector<1x1x256xf32>
    %cst_14 = arith.constant dense<0.000000e+00> : vector<1xf32>
    %35 = vector.multi_reduction <add>, %34, %cst_14 [1, 2] : vector<1x1x256xf32> to vector<1xf32>
    %36 = vector.shape_cast %35 : vector<1xf32> to vector<1x1x1xf32>
    %37 = vector.extract %36[0, 0, 0] : f32 from vector<1x1x1xf32>
    %38 = vector.broadcast %37 : f32 to vector<1x128xf32>
    %c0_15 = arith.constant 0 : index
    %c0_16 = arith.constant 0 : index
    %c0_17 = arith.constant 0 : index
    %c0_18 = arith.constant 0 : index
    %39 = vector.load %arg6[%c0_15, %c0_16, %c0_17, %c0_18] : memref<1x1x1x128xf32, #tpu.memory_space<vmem>>, vector<1x1x1x128xf32>
    %40 = vector.shape_cast %39 : vector<1x1x1x128xf32> to vector<1x128xf32>
    %41 = vector.shape_cast %38 : vector<1x128xf32> to vector<1x1x1x128xf32>
    tpu.vector_store %arg6[%c0_15, %c0_16, %c0_17, %c0_18], %41 {strides = array<i32>} : memref<1x1x1x128xf32, #tpu.memory_space<vmem>>, vector<1x1x1x128xf32>,
    return
  }
  func.func @transform_0(%arg0: i32, %arg1: i32, %arg2: i32) -> (i32, i32, i32) {
    %c0_i32 = arith.constant 0 : i32
    return %arg0, %arg2, %arg1 : i32, i32, i32
  }
  func.func @transform_1(%arg0: i32, %arg1: i32, %arg2: i32) -> (i32, i32, i32) {
    %c0_i32 = arith.constant 0 : i32
    %c0_i32_0 = arith.constant 0 : i32
    return %arg0, %c0_i32, %arg1 : i32, i32, i32
  }
  func.func @transform_2(%arg0: i32, %arg1: i32, %arg2: i32) -> (i32, i32, i32, i32) {
    %c0_i32 = arith.constant 0 : i32
    %c0_i32_0 = arith.constant 0 : i32
    %c0_i32_1 = arith.constant 0 : i32
    return %arg0, %arg1, %c0_i32, %c0_i32_0 : i32, i32, i32, i32
  }
  func.func @transform_3(%arg0: i32, %arg1: i32, %arg2: i32) -> (i32, i32, i32, i32) {
    %c0_i32 = arith.constant 0 : i32
    %c0_i32_0 = arith.constant 0 : i32
    %c0_i32_1 = arith.constant 0 : i32
    return %arg0, %arg1, %c0_i32, %c0_i32_0 : i32, i32, i32, i32
  }
}

</mosaic_0001>

<llo_original>
// kernel: tpu_custom_call.1
$region0: #{tpu_custom_call.1}
  #allocation0 [shape = 'u32[]', space=smem, size = 0x4, offset = 0x4, fixed_abs, tag = 'smem constant byte address 0x4 - core index']
  #allocation1 [shape = 'u32[144,128]{1,0:T(1,128)}', space=vmem, size = 0x12000, scoped, tag = 'internal scratch']
  #allocation2 [shape = 'f32[1,128]{1,0:T(1,128)}', space=vmem, size = 0x200, scoped, tag = 'scratch operand']
  #allocation3 [shape = 'f32[1,128]{1,0:T(1,128)}', space=vmem, size = 0x200, scoped, tag = 'scratch operand']
  #allocation4 [shape = 'f32[1,128]{1,0:T(1,128)}', space=vmem, size = 0x200, scoped, tag = 'scratch operand']
  %s0 = inlined_call_operand.hbm [shape: f32[2,4,256], index: 0, kind: input, shape index: {}]
  %s1 = inlined_call_operand.hbm [shape: s32[2,1,256], index: 1, kind: input, shape index: {}]
  %s2 = inlined_call_operand.hbm [shape: f32[2,1,1,128], index: 2, kind: output, shape index: {0}]
  %s3 = inlined_call_operand.hbm [shape: f32[2,1,1,128], index: 3, kind: output, shape index: {1}]
  %4 = xla_tuple %s2, %s3
  %s5 = sld [smem:[#allocation0]]
  $region57: #{tpu_custom_call.1} parent=0
    _
  %s7 = ssub.s32 1, %s5
  %s8 = scalar_select 0, %s7, %s5
  $region1: #{tpu_custom_call.1} parent=0
    #allocation5 [shape = 'u8[8192]{0}', space=vmem, size = 0x2000, scoped, tag = 'input window, operand 0']
    #allocation6 [shape = 's32[2]{0}', space=sflag, size = 0x8, scoped, tag = 'scoped memory for tpu_custom_call.1']
    #allocation7 [shape = 's32[2]{0}', space=sflag, size = 0x8, scoped, tag = 'scoped memory for tpu_custom_call.1']
    #allocation8 [shape = 'u8[2048]{0}', space=vmem, size = 0x800, scoped, tag = 'input window, operand 1']
    #allocation9 [shape = 's32[2]{0}', space=sflag, size = 0x8, scoped, tag = 'scoped memory for tpu_custom_call.1']
    #allocation10 [shape = 'u8[1024]{0}', space=vmem, size = 0x400, scoped, tag = 'output window, operand 0']
    #allocation11 [shape = 'u8[1024]{0}', space=vmem, size = 0x400, scoped, tag = 'output window, operand 1']
    #allocation12 [shape = 's32[2]{0}', space=sflag, size = 0x8, scoped, tag = 'scoped memory for tpu_custom_call.1']
    %9 = vsyncpa [#allocation6], 0
    %s10 = scalar_lea.sflag [#allocation6], 1
    %11 = vsyncpa %s10, 0
    %12 = vsyncpa [#allocation9], 0
    %s13 = scalar_lea.sflag [#allocation9], 1
    %14 = vsyncpa %s13, 0
    %15 = vsyncpa [#allocation7], 0
    %s16 = scalar_lea.sflag [#allocation7], 1
    %17 = vsyncpa %s16, 0
    %18 = vsyncpa [#allocation12], 0
    %s19 = scalar_lea.sflag [#allocation12], 1
    %20 = vsyncpa %s19, 0
    loop: start=0, step=1, limit=4
    $region2: #{tpu_custom_call.1} parent=1 // loop_pre_header
      _
    $region3: #{tpu_custom_call.1} parent=1 // loop_header
      %s22 = sphi 0, %s26
      %p23 = scmp.ge.s32.totalorder %s22, 4
      %s29 = sphi 0, %s48
      %s30 = sphi 0, %s44
      %s31 = sphi 0, %s40
      %s32 = sphi 0, %s29
      %s33 = sphi 0, %s30
      %s34 = sphi 0, %s31
      %s35 = sphi 0, %s32
      %s36 = sphi 0, %s33
      %s37 = sphi 0, %s34
      %s55 = sphi 0, %s57
      %s58 = sphi 0, %s55
      %s59 = sphi 0, %s58
      %s75 = sphi 0, %s59
      %s83 = sphi 0, %s85
      %s86 = sphi 0, %s83
      %s87 = sphi 0, %s86
      %s103 = sphi 0, %s87
      %s111 = sphi 0, %s113
      %s114 = sphi 0, %s111
      %s115 = sphi 0, %s114
      %s131 = sphi 0, %s115
      %s139 = sphi 0, %s141
      %s142 = sphi 0, %s139
      %s143 = sphi 0, %s142
      %s159 = sphi 0, %s143
    $region4: #{tpu_custom_call.1} parent=1 // loop_header_branch
      %25 = sbr.rel (%p23) target = $region8
    $region5: #{tpu_custom_call.1} parent=1 // loop_body
      %s27 = ssub.s32 %s22, 1
      %s28 = ssub.s32 %s22, 2
      %s38 = sadd.s32 1, %s31
      %p39 = scmp.ge.s32.totalorder %s38, 1
      %s40 = scalar_select %p39, 0, %s38
      %s41 = sadd.s32 1, %s30
      %s42 = scalar_select %p39, %s41, %s30
      %p43 = scmp.ge.s32.totalorder %s42, 1
      %s44 = scalar_select %p43, 0, %s42
      %s45 = sadd.s32 1, %s29
      %s46 = scalar_select %p43, %s45, %s29
      %p47 = scmp.ge.s32.totalorder %s46, 2
      %s48 = scalar_select %p47, 0, %s46
      %s49 = ssub.s32 %s29, %s48
      %s50 = ssub.s32 %s31, %s40
      %s51 = sor.u32 %s49, %s50
      %s52 = ssub.s32 %s30, %s44
      %s53 = sor.u32 %s51, %s52
      %p54 = scmp.eq.s32.totalorder %s53, 0
      %s56 = sadd.s32 %s55, 1
      %s57 = scalar_select %p54, %s55, %s56
      %p60 = pneg %p54
      %p61 = scmp.eq.s32.totalorder %s22, 1
      %p62 = por %p60, %p61
      %p63 = scmp.ne.s32.totalorder %s55, %s58
      %p64 = scmp.eq.s32.totalorder %s22, 0
      %p65 = por %p63, %p64
      %p66 = scmp.ne.s32.totalorder %s55, %s58
      %p67 = scmp.eq.s32.totalorder %s27, 1
      %p68 = por %p66, %p67
      %p69 = scmp.ne.s32.totalorder %s58, %s59
      %p70 = scmp.eq.s32.totalorder %s27, 0
      %p71 = por %p69, %p70
      %p72 = scmp.ne.s32.totalorder %s58, %s59
      %p73 = scmp.eq.s32.totalorder %s28, 1
      %p74 = por %p72, %p73
      %p76 = scmp.ne.s32.totalorder %s59, %s75
      %p77 = scmp.eq.s32.totalorder %s28, 0
      %p78 = por %p76, %p77
      %s79 = ssub.s32 %s29, %s48
      %s80 = ssub.s32 %s30, %s44
      %s81 = sor.u32 %s79, %s80
      %p82 = scmp.eq.s32.totalorder %s81, 0
      %s84 = sadd.s32 %s83, 1
      %s85 = scalar_select %p82, %s83, %s84
      %p88 = pneg %p82
      %p89 = scmp.eq.s32.totalorder %s22, 1
      %p90 = por %p88, %p89
      %p91 = scmp.ne.s32.totalorder %s83, %s86
      %p92 = scmp.eq.s32.totalorder %s22, 0
      %p93 = por %p91, %p92
      %p94 = scmp.ne.s32.totalorder %s83, %s86
      %p95 = scmp.eq.s32.totalorder %s27, 1
      %p96 = por %p94, %p95
      %p97 = scmp.ne.s32.totalorder %s86, %s87
      %p98 = scmp.eq.s32.totalorder %s27, 0
      %p99 = por %p97, %p98
      %p100 = scmp.ne.s32.totalorder %s86, %s87
      %p101 = scmp.eq.s32.totalorder %s28, 1
      %p102 = por %p100, %p101
      %p104 = scmp.ne.s32.totalorder %s87, %s103
      %p105 = scmp.eq.s32.totalorder %s28, 0
      %p106 = por %p104, %p105
      %s107 = ssub.s32 %s29, %s48
      %s108 = ssub.s32 %s30, %s44
      %s109 = sor.u32 %s107, %s108
      %p110 = scmp.eq.s32.totalorder %s109, 0
      %s112 = sadd.s32 %s111, 1
      %s113 = scalar_select %p110, %s111, %s112
      %p116 = pneg %p110
      %p117 = scmp.eq.s32.totalorder %s22, 1
      %p118 = por %p116, %p117
      %p119 = scmp.ne.s32.totalorder %s111, %s114
      %p120 = scmp.eq.s32.totalorder %s22, 0
      %p121 = por %p119, %p120
      %p122 = scmp.ne.s32.totalorder %s111, %s114
      %p123 = scmp.eq.s32.totalorder %s27, 1
      %p124 = por %p122, %p123
      %p125 = scmp.ne.s32.totalorder %s114, %s115
      %p126 = scmp.eq.s32.totalorder %s27, 0
      %p127 = por %p125, %p126
      %p128 = scmp.ne.s32.totalorder %s114, %s115
      %p129 = scmp.eq.s32.totalorder %s28, 1
      %p130 = por %p128, %p129
      %p132 = scmp.ne.s32.totalorder %s115, %s131
      %p133 = scmp.eq.s32.totalorder %s28, 0
      %p134 = por %p132, %p133
      %s135 = ssub.s32 %s29, %s48
      %s136 = ssub.s32 %s30, %s44
      %s137 = sor.u32 %s135, %s136
      %p138 = scmp.eq.s32.totalorder %s137, 0
      %s140 = sadd.s32 %s139, 1
      %s141 = scalar_select %p138, %s139, %s140
      %p144 = pneg %p138
      %p145 = scmp.eq.s32.totalorder %s22, 1
      %p146 = por %p144, %p145
      %p147 = scmp.ne.s32.totalorder %s139, %s142
      %p148 = scmp.eq.s32.totalorder %s22, 0
      %p149 = por %p147, %p148
      %p150 = scmp.ne.s32.totalorder %s139, %s142
      %p151 = scmp.eq.s32.totalorder %s27, 1
      %p152 = por %p150, %p151
      %p153 = scmp.ne.s32.totalorder %s142, %s143
      %p154 = scmp.eq.s32.totalorder %s27, 0
      %p155 = por %p153, %p154
      %p156 = scmp.ne.s32.totalorder %s142, %s143
      %p157 = scmp.eq.s32.totalorder %s28, 1
      %p158 = por %p156, %p157
      %p160 = scmp.ne.s32.totalorder %s143, %s159
      %p161 = scmp.eq.s32.totalorder %s28, 0
      %p162 = por %p160, %p161
      %p163 = scmp.le.s32.totalorder 1, %s22
      %p164 = scmp.lt.s32.totalorder %s22, 3
      %p165 = pnand %p163, %p164
      %p166 = pneg %p165
      // Predicated region
      $region9: #{tpu_custom_call.1} parent=5 // pred_check
        _
      $region10: #{tpu_custom_call.1} parent=5 // pred_check_branch
        %168 = sbr.rel (%p165) target = $region12
      $region11: #{tpu_custom_call.1} parent=5 // pred_region
        %s169 = ssub.s32 %s22, 1
      $region12: #{tpu_custom_call.1} parent=5 // pred_fallthru
        _
      %p170 = scmp.lt.s32.totalorder %s22, 2
      // Predicated region
      $region13: #{tpu_custom_call.1} parent=5 // pred_check
        %p171 = pneg %p170
      $region14: #{tpu_custom_call.1} parent=5 // pred_check_branch
        %173 = sbr.rel (%p171) target = $region16
      $region15: #{tpu_custom_call.1} parent=5 // pred_region
        // Predicated region
        $region17: #{tpu_custom_call.1} parent=15 // pred_check
          %p174 = pneg %p65
        $region18: #{tpu_custom_call.1} parent=15 // pred_check_branch
          %176 = sbr.rel (%p174) target = $region20
        $region19: #{tpu_custom_call.1} parent=15 // pred_region
          %s177 = sand.u32 %s55, 1
          %s178 = scalar_lea.sflag [#allocation6], %s177
          %s179 = sand.u32 %s55, 1
          %s180 = smul.addr %s179, 8
          %s181 = scalar_lea.vmem [#allocation5], %s180
          %s182 = smul.u32 2, %s30
          %s184 = ssub.s32 128, 128
          %185 = vsyncadd %s178, %s184
          %s186 = smul.addr %s31, 2
          %s187 = sadd.s32 %s182, %s186
          %s188 = smul.addr %s29, 2
          %s189 = sadd.s32 %s187, %s188
          %s190 = smul.addr %s189, 64
          %s191 = scalar_lea.hbm %s0, %s190
          %s193 = sshll.u32 %s181, 4
          %s194 = int_to_ptr.vmem [resolvable:$true] %s193
          %196 = dma.hbm_to_vmem [thread:$0]  %s191, 128, %s194, %s178
        $region20: #{tpu_custom_call.1} parent=15 // pred_fallthru
          _
        // Predicated region
        $region21: #{tpu_custom_call.1} parent=15 // pred_check
          %p197 = pneg %p93
        $region22: #{tpu_custom_call.1} parent=15 // pred_check_branch
          %199 = sbr.rel (%p197) target = $region24
        $region23: #{tpu_custom_call.1} parent=15 // pred_region
          %s200 = sand.u32 %s83, 1
          %s201 = scalar_lea.sflag [#allocation9], %s200
          %s202 = sand.u32 %s83, 1
          %s203 = smul.addr %s202, 2
          %s204 = scalar_lea.vmem [#allocation8], %s203
          %s205 = smul.u32 2, %s30
          %s207 = ssub.s32 32, 32
          %208 = vsyncadd %s201, %s207
          %s209 = smul.addr %s29, 2
          %s210 = sadd.s32 %s205, %s209
          %s211 = smul.addr %s210, 16
          %s212 = scalar_lea.hbm %s1, %s211
          %s214 = sshll.u32 %s204, 4
          %s215 = int_to_ptr.vmem [resolvable:$true] %s214
          %217 = dma.hbm_to_vmem [thread:$0]  %s212, 32, %s215, %s201
        $region24: #{tpu_custom_call.1} parent=15 // pred_fallthru
          _
      $region16: #{tpu_custom_call.1} parent=5 // pred_fallthru
        _
      %p218 = scmp.le.s32.totalorder 1, %s22
      %p219 = scmp.lt.s32.totalorder %s22, 3
      %p220 = pnand %p218, %p219
      %p221 = pneg %p220
      // Predicated region
      $region25: #{tpu_custom_call.1} parent=5 // pred_check
        _
      $region26: #{tpu_custom_call.1} parent=5 // pred_check_branch
        %223 = sbr.rel (%p220) target = $region28
      $region27: #{tpu_custom_call.1} parent=5 // pred_region
        %s224 = ssub.s32 %s22, 1
        %s225 = sand.u32 %s58, 1
        %s226 = scalar_lea.sflag [#allocation6], %s225
        %s227 = sand.u32 %s58, 1
        %s228 = smul.addr %s227, 8
        %s229 = scalar_lea.vmem [#allocation5], %s228
        // Predicated region
        $region29: #{tpu_custom_call.1} parent=27 // pred_check
          %p230 = pneg %p71
        $region30: #{tpu_custom_call.1} parent=27 // pred_check_branch
          %232 = sbr.rel (%p230) target = $region32
        $region31: #{tpu_custom_call.1} parent=27 // pred_region
          %233 = dma.done %s226, 128
        $region32: #{tpu_custom_call.1} parent=27 // pred_fallthru
          _
        %s234 = sand.u32 %s86, 1
        %s235 = scalar_lea.sflag [#allocation9], %s234
        %s236 = sand.u32 %s86, 1
        %s237 = smul.addr %s236, 2
        %s238 = scalar_lea.vmem [#allocation8], %s237
        // Predicated region
        $region33: #{tpu_custom_call.1} parent=27 // pred_check
          %p239 = pneg %p99
        $region34: #{tpu_custom_call.1} parent=27 // pred_check_branch
          %241 = sbr.rel (%p239) target = $region36
        $region35: #{tpu_custom_call.1} parent=27 // pred_region
          %242 = dma.done %s235, 32
        $region36: #{tpu_custom_call.1} parent=27 // pred_fallthru
          _
        %s243 = sand.u32 %s58, 1
        %s244 = scalar_lea.sflag [#allocation6], %s243
        %s245 = sand.u32 %s58, 1
        %s246 = smul.addr %s245, 8
        %s247 = scalar_lea.vmem [#allocation5], %s246
        %p248 = pneg %p71
        %p249 = pneg %p68
        %s250 = sand.u32 %s86, 1
        %s251 = scalar_lea.sflag [#allocation9], %s250
        %s252 = sand.u32 %s86, 1
        %s253 = smul.addr %s252, 2
        %s254 = scalar_lea.vmem [#allocation8], %s253
        %p255 = pneg %p99
        %p256 = pneg %p96
        %p257 = pneg %p127
        %p258 = pneg %p124
        %s259 = sand.u32 %s114, 1
        %s260 = scalar_lea.sflag [#allocation7], %s259
        %s261 = sand.u32 %s114, 1
        %s262 = scalar_lea.vmem [#allocation10], %s261
        %p263 = pneg %p155
        %p264 = pneg %p152
        %s265 = sand.u32 %s142, 1
        %s266 = scalar_lea.sflag [#allocation12], %s265
        %s267 = sand.u32 %s142, 1
        %s268 = scalar_lea.vmem [#allocation11], %s267
        %s269 = smul.u32 2, %s33
        %s270 = smul.u32 2, %s33
        %v271 = vld [vmem:[%s238] sm:$0x3]
        %v272 = vld [vmem:[%s229] sm:$0xff]
        %v273 = vlaneseq
        %v274 = vshrl.u32 %v273, 7
        %v276 = vcombine.high %v272, %v272
        %vm278 = vcmask 1043456
        %v279 = vsel %vm278, %v272, -inf
        %v280 = vrot.slane %v279, 4
        %v281 = vmax.f32 %v279, %v280
        %v282 = vrot.slane %v281, 2
        %v283 = vmax.f32 %v281, %v282
        %v284 = vrot.slane %v283, 1
        %v285 = vmax.f32 %v283, %v284
        %v286 = vsel %vm278, %v276, -inf
        %v287 = vrot.slane %v286, 4
        %v288 = vmax.f32 %v286, %v287
        %v289 = vrot.slane %v288, 2
        %v290 = vmax.f32 %v288, %v289
        %v291 = vrot.slane %v290, 1
        %v292 = vmax.f32 %v290, %v291
        %v295 = vcombine.low %v285, %v292
        %v297 = vsub.f32 %v272, %v295
        %v298 = vlaneseq
        %v299 = vshrl.u32 %v298, 7
        %v300 = vsub.s32 0, %v299
        %v301 = vrot.slane %v271, %v300
        %v302 = vlaneseq
        %v303 = vshrl.u32 %v302, 7
        %v304 = vsub.s32 1, %v303
        %v305 = vrot.slane %v271, %v304
        %vm306 = vcmp.eq.s32.totalorder %v274, %v301
        %vm307 = vcmp.eq.s32.totalorder %v274, %v305
        %v309 = vcombine.high %v297, %v297
        %v311 = vsel %vm306, %v297, 0.0
        %v312 = vsel %vm307, %v309, 0.0
        %v313 = vsel %vm278, %v311, 0.0
        %v314 = vrot.slane %v313, 4
        %v315 = vadd.f32 %v313, %v314
        %v316 = vrot.slane %v315, 2
        %v317 = vadd.f32 %v315, %v316
        %v318 = vrot.slane %v317, 1
        %v319 = vadd.f32 %v317, %v318
        %v320 = vsel %vm278, %v312, 0.0
        %v321 = vrot.slane %v320, 4
        %v322 = vadd.f32 %v320, %v321
        %v323 = vrot.slane %v322, 2
        %v324 = vadd.f32 %v322, %v323
        %v325 = vrot.slane %v324, 1
        %v326 = vadd.f32 %v324, %v325
        %v327 = vmul.f32 %v297, 1.442695
        %v328 = vpow.pop %v327
        %v330 = vcombine.high %v328, %v328
        %v332 = vsel %vm278, %v328, 0.0
        %v333 = vrot.slane %v332, 4
        %v334 = vadd.f32 %v332, %v333
        %v335 = vrot.slane %v334, 2
        %v336 = vadd.f32 %v334, %v335
        %v337 = vrot.slane %v336, 1
        %v338 = vadd.f32 %v336, %v337
        %v339 = vsel %vm278, %v330, 0.0
        %v340 = vrot.slane %v339, 4
        %v341 = vadd.f32 %v339, %v340
        %v342 = vrot.slane %v341, 2
        %v343 = vadd.f32 %v341, %v342
        %v344 = vrot.slane %v343, 1
        %v345 = vadd.f32 %v343, %v344
        %v346 = vlog2.pop %v338
        %v347 = vmul.f32 %v346, 0.6931472
        %v348 = vlog2.pop %v345
        %v349 = vmul.f32 %v348, 0.6931472
        %v350 = vsub.f32 %v347, %v319
        %v351 = vsub.f32 %v349, %v326
        %vm352 = vcmp.ne.s32.totalorder %v271, 4294967196
        %v355 = vcombine.low %v350, %v351
        %v357 = vunpack.c.l.s4 1966171168
        %v358 = vunpack.c.0.s8 %v357
        %v359 = vlaneseq
        %v360 = vshrl.u32 %v359, 7
        %v361 = vsub.s32 %v358, %v360
        %v362 = vrot.slane %v355, %v361
        %v364 = vunpack.c.l.s4 1966171168
        %v365 = vunpack.c.0.s8 %v364
        %v366 = vlaneseq
        %v367 = vshrl.u32 %v366, 7
        %v368 = vsub.s32 %v365, %v367
        %v369 = vrot.slane %v362, %v368
        %v371 = vsel %vm352, %v369, 0.0
        %v373 = vlaneseq
        %v374 = vshrl.u32 %v373, 7
        %v375 = vsub.s32 0, %v374
        %v376 = vrot.slane %v371, %v375
        %v377 = vlaneseq
        %v378 = vshrl.u32 %v377, 7
        %v379 = vsub.s32 1, %v378
        %v380 = vrot.slane %v371, %v379
        %vm383 = vcmask 1040384
        %v384 = vsel %vm383, %v376, 0.0
        %v385 = vsel %vm383, %v380, 0.0
        %v386 = vadd.f32 %v384, %v385
        %387 = vadd.xlane.f32.xlu0 %v386
        %v388 = vpop.xlane.xlu0 %387
        %v389 = vrot.slane %v388, 4
        %v390 = vadd.f32 %v388, %v389
        %v391 = vrot.slane %v390, 2
        %v392 = vadd.f32 %v390, %v391
        %v393 = vrot.slane %v392, 1
        %v394 = vadd.f32 %v392, %v393
        %s395 = vtos %v394
        %v396 = vstv %s395
        %397 = vst [vmem:[%s262] sm:$0x1] %v396
        %v398 = vsel %vm352, 1, 0
        %v399 = vcvt.s32.f32 %v398
        %v401 = vlaneseq
        %v402 = vshrl.u32 %v401, 7
        %v403 = vsub.s32 0, %v402
        %v404 = vrot.slane %v399, %v403
        %v405 = vlaneseq
        %v406 = vshrl.u32 %v405, 7
        %v407 = vsub.s32 1, %v406
        %v408 = vrot.slane %v399, %v407
        %v411 = vsel %vm383, %v404, 0.0
        %v412 = vsel %vm383, %v408, 0.0
        %v413 = vadd.f32 %v411, %v412
        %414 = vadd.xlane.f32.xlu0 %v413
        %v415 = vpop.xlane.xlu0 %414
        %v416 = vrot.slane %v415, 4
        %v417 = vadd.f32 %v415, %v416
        %v418 = vrot.slane %v417, 2
        %v419 = vadd.f32 %v417, %v418
        %v420 = vrot.slane %v419, 1
        %v421 = vadd.f32 %v419, %v420
        %s422 = vtos %v421
        %v423 = vstv %s422
        %424 = vst [vmem:[%s268] sm:$0x1] %v423
        %s425 = sand.u32 %s114, 1
        %s426 = scalar_lea.sflag [#allocation7], %s425
        %s427 = sand.u32 %s114, 1
        %s428 = scalar_lea.vmem [#allocation10], %s427
        %s429 = sand.u32 %s142, 1
        %s430 = scalar_lea.sflag [#allocation12], %s429
        %s431 = sand.u32 %s142, 1
        %s432 = scalar_lea.vmem [#allocation11], %s431
        // Predicated region
        $region37: #{tpu_custom_call.1} parent=27 // pred_check
          %p433 = pneg %p124
        $region38: #{tpu_custom_call.1} parent=27 // pred_check_branch
          %435 = sbr.rel (%p433) target = $region40
        $region39: #{tpu_custom_call.1} parent=27 // pred_region
          %s437 = ssub.s32 16, 16
          %438 = vsyncadd %s426, %s437
          %s439 = sadd.s32 %s33, %s32
          %s440 = smul.addr %s439, 16
          %s441 = scalar_lea.hbm %s2, %s440
          %s443 = sshll.u32 %s428, 4
          %s444 = int_to_ptr.vmem [resolvable:$true] %s443
          %446 = dma.vmem_to_hbm [thread:$0]  %s444, 16, %s441, %s426
        $region40: #{tpu_custom_call.1} parent=27 // pred_fallthru
          _
        // Predicated region
        $region41: #{tpu_custom_call.1} parent=27 // pred_check
          %p447 = pneg %p152
        $region42: #{tpu_custom_call.1} parent=27 // pred_check_branch
          %449 = sbr.rel (%p447) target = $region44
        $region43: #{tpu_custom_call.1} parent=27 // pred_region
          %s451 = ssub.s32 16, 16
          %452 = vsyncadd %s430, %s451
          %s453 = sadd.s32 %s33, %s32
          %s454 = smul.addr %s453, 16
          %s455 = scalar_lea.hbm %s3, %s454
          %s457 = sshll.u32 %s432, 4
          %s458 = int_to_ptr.vmem [resolvable:$true] %s457
          %460 = dma.vmem_to_hbm [thread:$0]  %s458, 16, %s455, %s430
        $region44: #{tpu_custom_call.1} parent=27 // pred_fallthru
          _
      $region28: #{tpu_custom_call.1} parent=5 // pred_fallthru
        _
      %p461 = scmp.le.s32.totalorder 2, %s22
      // Predicated region
      $region45: #{tpu_custom_call.1} parent=5 // pred_check
        %p462 = pneg %p461
      $region46: #{tpu_custom_call.1} parent=5 // pred_check_branch
        %464 = sbr.rel (%p462) target = $region48
      $region47: #{tpu_custom_call.1} parent=5 // pred_region
        %s465 = ssub.s32 %s22, 2
        // Predicated region
        $region49: #{tpu_custom_call.1} parent=47 // pred_check
          %p466 = pneg %p130
        $region50: #{tpu_custom_call.1} parent=47 // pred_check_branch
          %468 = sbr.rel (%p466) target = $region52
        $region51: #{tpu_custom_call.1} parent=47 // pred_region
          %s469 = sand.u32 %s115, 1
          %s470 = scalar_lea.sflag [#allocation7], %s469
          %s471 = sand.u32 %s115, 1
          %s472 = scalar_lea.vmem [#allocation10], %s471
          %473 = dma.done %s470, 16
        $region52: #{tpu_custom_call.1} parent=47 // pred_fallthru
          _
        // Predicated region
        $region53: #{tpu_custom_call.1} parent=47 // pred_check
          %p474 = pneg %p158
        $region54: #{tpu_custom_call.1} parent=47 // pred_check_branch
          %476 = sbr.rel (%p474) target = $region56
        $region55: #{tpu_custom_call.1} parent=47 // pred_region
          %s477 = sand.u32 %s143, 1
          %s478 = scalar_lea.sflag [#allocation12], %s477
          %s479 = sand.u32 %s143, 1
          %s480 = scalar_lea.vmem [#allocation11], %s479
          %481 = dma.done %s478, 16
        $region56: #{tpu_custom_call.1} parent=47 // pred_fallthru
          _
      $region48: #{tpu_custom_call.1} parent=5 // pred_fallthru
        _
    $region6: #{tpu_custom_call.1} parent=1 // loop_footer
      %s26 = sadd.s32 1, %s22
    $region7: #{tpu_custom_call.1} parent=1 // loop_footer_branch
      %21 = sbr.rel target = $region3
    $region8: #{tpu_custom_call.1} parent=1 // loop_exit
      _
    %482 = vsyncpa [#allocation6], 1
    %s483 = scalar_lea.sflag [#allocation6], 1
    %484 = vsyncpa %s483, 1
    %485 = vsyncpa [#allocation9], 1
    %s486 = scalar_lea.sflag [#allocation9], 1
    %487 = vsyncpa %s486, 1
    %488 = vsyncpa [#allocation7], 1
    %s489 = scalar_lea.sflag [#allocation7], 1
    %490 = vsyncpa %s489, 1
    %491 = vsyncpa [#allocation12], 1
    %s492 = scalar_lea.sflag [#allocation12], 1
    %493 = vsyncpa %s492, 1

</llo_original>
